<compile_context>
chip_gen: v6e
topology: v6e:2x2x1
jax: 0.10.0
libtpu: 0.0.40
codegen_flags: <defaults>
</compile_context>

<pallas_src>
import jax
import jax.numpy as jnp
from jax.experimental import pallas as pl
from jax.experimental.pallas import tpu as pltpu


def _pointnet_a_kernel(f_ref, c_ref, w1f_ref, w1c_ref, b1_ref, w2_ref, b2_ref,
                       o_ref):
    # f_ref: (1, Cin, TN), c_ref: (1, 3, TN)  — points on the lane axis.
    n = pl.program_id(1)

    f = f_ref[0]                                                      # (Cin, TN)
    c = c_ref[0]                                                      # (3,  TN)

    # layer 1: 1x1 conv (concat realized as two matmuls) + folded-BN shift + ReLU
    h = jnp.dot(w1f_ref[...], f, preferred_element_type=jnp.float32)  # (H1, TN)
    h = h + jnp.dot(w1c_ref[...], c, preferred_element_type=jnp.float32)
    h = jnp.maximum(h + b1_ref[...], 0.0)

    # layer 2
    h = jnp.dot(w2_ref[...], h, preferred_element_type=jnp.float32)   # (H2, TN)
    h = jnp.maximum(h + b2_ref[...], 0.0)

    # max over this tile of points (cross-lane reduce on the XLU)
    tile_max = jnp.max(h, axis=-1, keepdims=True)                     # (H2, 1)

    # running max: output block is resident across the (arbitrary) N axis
    @pl.when(n == 0)
    def _():
        o_ref[0] = jnp.full_like(o_ref[0], -jnp.inf)

    o_ref[0] = jnp.maximum(o_ref[0], tile_max)


def _choose_tile_n(n, max_tile=2048):
    """Largest multiple of 128 that divides N (capped at max_tile); full N if small
    or if no such divisor exists. Keeps per-step DMA blocks lane-dense and within
    the scoped-VMEM default on v5e/v6e/v7x (double-buffered input blocks are tiny)."""
    if n <= max_tile:
        return n
    t = (max_tile // 128) * 128
    while t >= 128:
        if n % t == 0:
            return t
        t -= 128
    return n  # fallback: one full-N block (correct; may need a higher vmem limit)


def pointnet_a_forward(features, coords, params):
    """features: (B, Cin, N) f32, coords: (B, 3, N) f32 (PyTorch NCW layout).
    Returns (out, coords_out) with out: (B, Cout, 1), coords_out: (B, 3, 1)."""
    w1, b1, w2, b2 = params            # w: BN-scale-folded (Cout, Cin); b: (Cout, 1)
    B, cin, N = features.shape
    h1 = w1.shape[0]
    h2 = w2.shape[0]

    # split the first layer's weights so the channel-concat happens in-kernel
    w1f = w1[:, :cin]                  # (H1, Cin)
    w1c = w1[:, cin:]                  # (H1, 3)

    tn = _choose_tile_n(N)
    n_tiles = N // tn

    features = features.astype(jnp.float32)
    coords = coords.astype(jnp.float32)

    out = pl.pallas_call(
        _pointnet_a_kernel,
        out_shape=jax.ShapeDtypeStruct((B, h2, 1), jnp.float32),
        grid_spec=pltpu.PrefetchScalarGridSpec(
            num_scalar_prefetch=0,
            grid=(B, n_tiles),                       # reduction (N) axis last
            in_specs=[
                pl.BlockSpec((1, cin, tn), lambda b, n: (b, 0, n)),
                pl.BlockSpec((1, 3, tn), lambda b, n: (b, 0, n)),
                pl.BlockSpec((h1, cin), lambda b, n: (0, 0)),
                pl.BlockSpec((h1, 3), lambda b, n: (0, 0)),
                pl.BlockSpec((h1, 1), lambda b, n: (0, 0)),
                pl.BlockSpec((h2, h1), lambda b, n: (0, 0)),
                pl.BlockSpec((h2, 1), lambda b, n: (0, 0)),
            ],
            # same block across n -> resident running-max accumulator
            out_specs=pl.BlockSpec((1, h2, 1), lambda b, n: (b, 0, 0)),
        ),
        compiler_params=pltpu.CompilerParams(
            dimension_semantics=("parallel", "arbitrary")),
    )(features, coords, w1f, w1c, b1, w2, b2)

    coords_out = jnp.zeros((B, 3, 1), dtype=jnp.float32)
    return out, coords_out


def make_params(key, cin_total, hidden_channels):
    """Deterministic Conv1d + BatchNorm1d params with eval-mode BN folded on host:
       y = (scale * W) x + shift,  scale = gamma / sqrt(var + eps),
       shift = scale * (conv_bias - running_mean) + beta.
    Weights are stored (Cout, Cin) so the kernel computes W @ x directly in NCW."""
    params = []
    c_prev = cin_total
    eps = 1e-5
    for c_out in hidden_channels:
        k_w, k_b, k_g, k_be, k_m, k_v, key = jax.random.split(key, 7)
        w = jax.random.normal(k_w, (c_out, c_prev), jnp.float32) * 0.1   # conv weight
        conv_b = jax.random.normal(k_b, (c_out,), jnp.float32) * 0.1     # conv bias
        gamma = 1.0 + 0.1 * jax.random.normal(k_g, (c_out,), jnp.float32)
        beta = 0.1 * jax.random.normal(k_be, (c_out,), jnp.float32)
        run_mean = 0.1 * jax.random.normal(k_m, (c_out,), jnp.float32)
        run_var = jnp.abs(1.0 + 0.1 * jax.random.normal(k_v, (c_out,), jnp.float32))
        scale = gamma / jnp.sqrt(run_var + eps)
        w_folded = scale[:, None] * w                     # fold BN scale into weights
        shift = scale * (conv_b - run_mean) + beta        # fold conv bias + BN shift
        params.extend([w_folded, shift[:, None]])
        c_prev = c_out
    return tuple(params)


def reference_forward(features, coords, params):
    """Pure-JAX reference mirroring the PyTorch module (NCW layout throughout)."""
    w1, b1, w2, b2 = params
    x = jnp.concatenate([features, coords], axis=1)          # (B, Cin+3, N)
    h = jnp.maximum(jnp.einsum('oc,bcn->bon', w1, x) + b1[None], 0.0)
    h = jnp.maximum(jnp.einsum('oc,bcn->bon', w2, h) + b2[None], 0.0)
    out = jnp.max(h, axis=-1, keepdims=True)                 # (B, Cout, 1)
    return out, jnp.zeros((coords.shape[0], 3, 1), jnp.float32)


if __name__ == "__main__":
    key = jax.random.PRNGKey(0)
    k_f, k_c, k_p = jax.random.split(key, 3)

    B, CIN, N = 2, 4, 16
    hidden = [32, 64]          # SharedMLP(in=CIN+3, out_channels=[32, 64], dim=1)
    include_coordinates = True

    features = jax.random.normal(k_f, (B, CIN, N), jnp.float32)
    coords = jax.random.normal(k_c, (B, 3, N), jnp.float32)

    params = make_params(k_p, CIN + (3 if include_coordinates else 0), hidden)

    out, coords_out = pointnet_a_forward(features, coords, params)
    out = jax.block_until_ready(out)
    coords_out = jax.block_until_ready(coords_out)

    ref_out, ref_coords = reference_forward(features, coords, params)
    assert out.shape == (B, hidden[-1], 1)
    assert coords_out.shape == (B, 3, 1)
    assert jnp.allclose(out, ref_out, atol=1e-4, rtol=1e-4)
    assert jnp.allclose(coords_out, ref_coords)

    # TODO(synk): optional bf16 fast path for the x stream (v6e) — skipped because
    # a host-side cast would add back the extra HBM pass this version removes.

    print("KERNEL_OK")
</pallas_src>

<mosaic_0001>
module attributes {stable_mosaic.version = 11 : i64} {
  func.func @_pointnet_a_kernel(%arg0: i32, %arg1: i32, %arg2: memref<1x4x16xf32, #tpu.memory_space<vmem>>, %arg3: memref<1x3x16xf32, #tpu.memory_space<vmem>>, %arg4: memref<32x4xf32, #tpu.memory_space<vmem>>, %arg5: memref<32x3xf32, #tpu.memory_space<vmem>>, %arg6: memref<32x1xf32, #tpu.memory_space<vmem>>, %arg7: memref<64x32xf32, #tpu.memory_space<vmem>>, %arg8: memref<64x1xf32, #tpu.memory_space<vmem>>, %arg9: memref<1x64x1xf32, #tpu.memory_space<vmem>>) attributes {dimension_semantics = [#tpu.dimension_semantics<parallel>, #tpu.dimension_semantics<arbitrary>], iteration_bounds = array<i64: 2, 1>, scalar_prefetch = 0 : i64, scratch_operands = 0 : i64, tpu.core_type = #tpu.core_type<tc>, window_params = [{transform_indices = @transform_0, window_bounds = array<i64: 1, 4, 16>}, {transform_indices = @transform_1, window_bounds = array<i64: 1, 3, 16>}, {pipeline_mode = #tpu.pipeline_mode<synchronous>, transform_indices = @transform_2, window_bounds = array<i64: 32, 4>}, {pipeline_mode = #tpu.pipeline_mode<synchronous>, transform_indices = @transform_3, window_bounds = array<i64: 32, 3>}, {pipeline_mode = #tpu.pipeline_mode<synchronous>, transform_indices = @transform_4, window_bounds = array<i64: 32, 1>}, {pipeline_mode = #tpu.pipeline_mode<synchronous>, transform_indices = @transform_5, window_bounds = array<i64: 64, 32>}, {pipeline_mode = #tpu.pipeline_mode<synchronous>, transform_indices = @transform_6, window_bounds = array<i64: 64, 1>}, {transform_indices = @transform_7, window_bounds = array<i64: 1, 64, 1>}]} {
    %c0 = arith.constant 0 : index
    %c0_0 = arith.constant 0 : index
    %c0_1 = arith.constant 0 : index
    %0 = vector.load %arg2[%c0, %c0_0, %c0_1] : memref<1x4x16xf32, #tpu.memory_space<vmem>>, vector<1x4x16xf32>
    %1 = vector.shape_cast %0 : vector<1x4x16xf32> to vector<4x16xf32>
    %c0_2 = arith.constant 0 : index
    %c0_3 = arith.constant 0 : index
    %c0_4 = arith.constant 0 : index
    %2 = vector.load %arg3[%c0_2, %c0_3, %c0_4] : memref<1x3x16xf32, #tpu.memory_space<vmem>>, vector<1x3x16xf32>
    %3 = vector.shape_cast %2 : vector<1x3x16xf32> to vector<3x16xf32>
    %c0_5 = arith.constant 0 : index
    %c0_6 = arith.constant 0 : index
    %4 = vector.load %arg4[%c0_5, %c0_6] : memref<32x4xf32, #tpu.memory_space<vmem>>, vector<32x4xf32>
    %cst = arith.constant dense<0.000000e+00> : vector<32x16xf32>
    %5 = tpu.matmul %4, %1, %cst {dimension_numbers = #tpu.dot_dimension_numbers<[1], [0], [0], [1], [0, 0, 1, 1], [], []>} : vector<32x4xf32>, vector<4x16xf32>, vector<32x16xf32> -> vector<32x16xf32>
    %c0_7 = arith.constant 0 : index
    %c0_8 = arith.constant 0 : index
    %6 = vector.load %arg5[%c0_7, %c0_8] : memref<32x3xf32, #tpu.memory_space<vmem>>, vector<32x3xf32>
    %cst_9 = arith.constant dense<0.000000e+00> : vector<32x16xf32>
    %7 = tpu.matmul %6, %3, %cst_9 {dimension_numbers = #tpu.dot_dimension_numbers<[1], [0], [0], [1], [0, 0, 1, 1], [], []>} : vector<32x3xf32>, vector<3x16xf32>, vector<32x16xf32> -> vector<32x16xf32>
    %8 = arith.addf %5, %7 : vector<32x16xf32>
    %c0_10 = arith.constant 0 : index
    %c0_11 = arith.constant 0 : index
    %9 = vector.load %arg6[%c0_10, %c0_11] : memref<32x1xf32, #tpu.memory_space<vmem>>, vector<32x1xf32>
    %10 = vector.broadcast %9 : vector<32x1xf32> to vector<32x16xf32>
    %11 = arith.addf %8, %10 : vector<32x16xf32>
    %cst_12 = arith.constant 0.000000e+00 : f32
    %12 = vector.broadcast %cst_12 : f32 to vector<32x16xf32>
    %13 = arith.maximumf %11, %12 : vector<32x16xf32>
    %c0_13 = arith.constant 0 : index
    %c0_14 = arith.constant 0 : index
    %14 = vector.load %arg7[%c0_13, %c0_14] : memref<64x32xf32, #tpu.memory_space<vmem>>, vector<64x32xf32>
    %cst_15 = arith.constant dense<0.000000e+00> : vector<64x16xf32>
    %15 = tpu.matmul %14, %13, %cst_15 {dimension_numbers = #tpu.dot_dimension_numbers<[1], [0], [0], [1], [0, 0, 1, 1], [], []>} : vector<64x32xf32>, vector<32x16xf32>, vector<64x16xf32> -> vector<64x16xf32>
    %c0_16 = arith.constant 0 : index
    %c0_17 = arith.constant 0 : index
    %16 = vector.load %arg8[%c0_16, %c0_17] : memref<64x1xf32, #tpu.memory_space<vmem>>, vector<64x1xf32>
    %17 = vector.broadcast %16 : vector<64x1xf32> to vector<64x16xf32>
    %18 = arith.addf %15, %17 : vector<64x16xf32>
    %cst_18 = arith.constant 0.000000e+00 : f32
    %19 = vector.broadcast %cst_18 : f32 to vector<64x16xf32>
    %20 = arith.maximumf %18, %19 : vector<64x16xf32>
    %cst_19 = arith.constant dense<0xFF800000> : vector<64xf32>
    %21 = vector.multi_reduction <maximumf>, %20, %cst_19 [1] : vector<64x16xf32> to vector<64xf32>
    %22 = vector.shape_cast %21 : vector<64xf32> to vector<64x1xf32>
    %c0_i32 = arith.constant 0 : i32
    %23 = arith.cmpi eq, %arg1, %c0_i32 : i32
    %24 = arith.extui %23 : i1 to i32
    %c0_i32_20 = arith.constant 0 : i32
    %25 = arith.cmpi ne, %24, %c0_i32_20 : i32
    scf.if %25 {
      %cst_27 = arith.constant 0xFF800000 : f32
      %32 = vector.broadcast %cst_27 : f32 to vector<64x1xf32>
      %c0_28 = arith.constant 0 : index
      %c0_29 = arith.constant 0 : index
      %c0_30 = arith.constant 0 : index
      %33 = vector.load %arg9[%c0_28, %c0_29, %c0_30] : memref<1x64x1xf32, #tpu.memory_space<vmem>>, vector<1x64x1xf32>
      %34 = vector.shape_cast %33 : vector<1x64x1xf32> to vector<64x1xf32>
      %35 = vector.shape_cast %32 : vector<64x1xf32> to vector<1x64x1xf32>
      tpu.vector_store %arg9[%c0_28, %c0_29, %c0_30], %35 {strides = array<i32>} : memref<1x64x1xf32, #tpu.memory_space<vmem>>, vector<1x64x1xf32>,
    } else {
    }
    %c0_21 = arith.constant 0 : index
    %c0_22 = arith.constant 0 : index
    %c0_23 = arith.constant 0 : index
    %26 = vector.load %arg9[%c0_21, %c0_22, %c0_23] : memref<1x64x1xf32, #tpu.memory_space<vmem>>, vector<1x64x1xf32>
    %27 = vector.shape_cast %26 : vector<1x64x1xf32> to vector<64x1xf32>
    %28 = arith.maximumf %27, %22 : vector<64x1xf32>
    %c0_24 = arith.constant 0 : index
    %c0_25 = arith.constant 0 : index
    %c0_26 = arith.constant 0 : index
    %29 = vector.load %arg9[%c0_24, %c0_25, %c0_26] : memref<1x64x1xf32, #tpu.memory_space<vmem>>, vector<1x64x1xf32>
    %30 = vector.shape_cast %29 : vector<1x64x1xf32> to vector<64x1xf32>
    %31 = vector.shape_cast %28 : vector<64x1xf32> to vector<1x64x1xf32>
    tpu.vector_store %arg9[%c0_24, %c0_25, %c0_26], %31 {strides = array<i32>} : memref<1x64x1xf32, #tpu.memory_space<vmem>>, vector<1x64x1xf32>,
    return
  }
  func.func @transform_0(%arg0: i32, %arg1: i32) -> (i32, i32, i32) {
    %c0_i32 = arith.constant 0 : i32
    %c0_i32_0 = arith.constant 0 : i32
    return %arg0, %c0_i32, %arg1 : i32, i32, i32
  }
  func.func @transform_1(%arg0: i32, %arg1: i32) -> (i32, i32, i32) {
    %c0_i32 = arith.constant 0 : i32
    %c0_i32_0 = arith.constant 0 : i32
    return %arg0, %c0_i32, %arg1 : i32, i32, i32
  }
  func.func @transform_2(%arg0: i32, %arg1: i32) -> (i32, i32) {
    %c0_i32 = arith.constant 0 : i32
    %c0_i32_0 = arith.constant 0 : i32
    %c0_i32_1 = arith.constant 0 : i32
    return %c0_i32, %c0_i32_0 : i32, i32
  }
  func.func @transform_3(%arg0: i32, %arg1: i32) -> (i32, i32) {
    %c0_i32 = arith.constant 0 : i32
    %c0_i32_0 = arith.constant 0 : i32
    %c0_i32_1 = arith.constant 0 : i32
    return %c0_i32, %c0_i32_0 : i32, i32
  }
  func.func @transform_4(%arg0: i32, %arg1: i32) -> (i32, i32) {
    %c0_i32 = arith.constant 0 : i32
    %c0_i32_0 = arith.constant 0 : i32
    %c0_i32_1 = arith.constant 0 : i32
    return %c0_i32, %c0_i32_0 : i32, i32
  }
  func.func @transform_5(%arg0: i32, %arg1: i32) -> (i32, i32) {
    %c0_i32 = arith.constant 0 : i32
    %c0_i32_0 = arith.constant 0 : i32
    %c0_i32_1 = arith.constant 0 : i32
    return %c0_i32, %c0_i32_0 : i32, i32
  }
  func.func @transform_6(%arg0: i32, %arg1: i32) -> (i32, i32) {
    %c0_i32 = arith.constant 0 : i32
    %c0_i32_0 = arith.constant 0 : i32
    %c0_i32_1 = arith.constant 0 : i32
    return %c0_i32, %c0_i32_0 : i32, i32
  }
  func.func @transform_7(%arg0: i32, %arg1: i32) -> (i32, i32, i32) {
    %c0_i32 = arith.constant 0 : i32
    %c0_i32_0 = arith.constant 0 : i32
    %c0_i32_1 = arith.constant 0 : i32
    return %arg0, %c0_i32, %c0_i32_0 : i32, i32, i32
  }
}

</mosaic_0001>

<llo_original>
// kernel: tpu_custom_call.1
$region0: #{tpu_custom_call.1}
  #allocation0 [shape = 'u32[]', space=smem, size = 0x4, offset = 0x4, fixed_abs, tag = 'smem constant byte address 0x4 - core index']
  #allocation1 [shape = 'u32[144,128]{1,0:T(1,128)}', space=vmem, size = 0x12000, scoped, tag = 'internal scratch']
  %s0 = inlined_call_operand.vmem [shape: f32[2,4,16], index: 0, kind: input, shape index: {}]
  %s1 = inlined_call_operand.vmem [shape: f32[2,3,16], index: 1, kind: input, shape index: {}]
  %s2 = inlined_call_operand.vmem [shape: f32[32,4], index: 2, kind: input, shape index: {}]
  %s3 = inlined_call_operand.vmem [shape: f32[32,3], index: 3, kind: input, shape index: {}]
  %s4 = inlined_call_operand.vmem [shape: f32[32,1], index: 4, kind: input, shape index: {}]
  %s5 = inlined_call_operand.vmem [shape: f32[64,32], index: 5, kind: input, shape index: {}]
  %s6 = inlined_call_operand.vmem [shape: f32[64,1], index: 6, kind: input, shape index: {}]
  %s7 = inlined_call_operand.vmem [shape: f32[2,64,1], index: 7, kind: output, shape index: {}]
  %s8 = sld [smem:[#allocation0]]
  $region65: #{tpu_custom_call.1} parent=0
    _
  %s10 = ssub.s32 1, %s8
  %s11 = scalar_select 0, %s10, %s8
  loop: start=0, step=1, limit=4
  $region2: #{tpu_custom_call.1} parent=0 // loop_pre_header
    _
  $region3: #{tpu_custom_call.1} parent=0 // loop_header
    %s13 = sphi 0, %s17
    %p14 = scmp.ge.s32.totalorder %s13, 4
    %s20 = sphi 0, %s32
    %s21 = sphi 0, %s28
    %s22 = sphi 0, %s20
    %s23 = sphi 0, %s21
    %s24 = sphi 0, %s22
    %s25 = sphi 0, %s23
    %s37 = sphi 0, %s39
    %s40 = sphi 0, %s37
    %s41 = sphi 0, %s40
    %s57 = sphi 0, %s41
    %s65 = sphi 0, %s67
    %s68 = sphi 0, %s65
    %s69 = sphi 0, %s68
    %s85 = sphi 0, %s69
    %s89 = sphi 0, %s89
    %s91 = sphi 0, %s89
    %s92 = sphi 0, %s91
    %s106 = sphi 0, %s92
    %s110 = sphi 0, %s110
    %s112 = sphi 0, %s110
    %s113 = sphi 0, %s112
    %s127 = sphi 0, %s113
    %s131 = sphi 0, %s131
    %s133 = sphi 0, %s131
    %s134 = sphi 0, %s133
    %s148 = sphi 0, %s134
    %s152 = sphi 0, %s152
    %s154 = sphi 0, %s152
    %s155 = sphi 0, %s154
    %s169 = sphi 0, %s155
    %s173 = sphi 0, %s173
    %s175 = sphi 0, %s173
    %s176 = sphi 0, %s175
    %s190 = sphi 0, %s176
    %s196 = sphi 0, %s198
    %s199 = sphi 0, %s196
    %s200 = sphi 0, %s199
    %s216 = sphi 0, %s200
  $region4: #{tpu_custom_call.1} parent=0 // loop_header_branch
    %16 = sbr.rel (%p14) target = $region8
  $region5: #{tpu_custom_call.1} parent=0 // loop_body
    %s18 = ssub.s32 %s13, 1
    %s19 = ssub.s32 %s13, 2
    %s26 = sadd.s32 1, %s21
    %p27 = scmp.ge.s32.totalorder %s26, 1
    %s28 = scalar_select %p27, 0, %s26
    %s29 = sadd.s32 1, %s20
    %s30 = scalar_select %p27, %s29, %s20
    %p31 = scmp.ge.s32.totalorder %s30, 2
    %s32 = scalar_select %p31, 0, %s30
    %s33 = ssub.s32 %s20, %s32
    %s34 = ssub.s32 %s21, %s28
    %s35 = sor.u32 %s33, %s34
    %p36 = scmp.eq.s32.totalorder %s35, 0
    %s38 = sadd.s32 %s37, 1
    %s39 = scalar_select %p36, %s37, %s38
    %p42 = pneg %p36
    %p43 = scmp.eq.s32.totalorder %s13, 1
    %p44 = por %p42, %p43
    %p45 = scmp.ne.s32.totalorder %s37, %s40
    %p46 = scmp.eq.s32.totalorder %s13, 0
    %p47 = por %p45, %p46
    %p48 = scmp.ne.s32.totalorder %s37, %s40
    %p49 = scmp.eq.s32.totalorder %s18, 1
    %p50 = por %p48, %p49
    %p51 = scmp.ne.s32.totalorder %s40, %s41
    %p52 = scmp.eq.s32.totalorder %s18, 0
    %p53 = por %p51, %p52
    %p54 = scmp.ne.s32.totalorder %s40, %s41
    %p55 = scmp.eq.s32.totalorder %s19, 1
    %p56 = por %p54, %p55
    %p58 = scmp.ne.s32.totalorder %s41, %s57
    %p59 = scmp.eq.s32.totalorder %s19, 0
    %p60 = por %p58, %p59
    %s61 = ssub.s32 %s20, %s32
    %s62 = ssub.s32 %s21, %s28
    %s63 = sor.u32 %s61, %s62
    %p64 = scmp.eq.s32.totalorder %s63, 0
    %s66 = sadd.s32 %s65, 1
    %s67 = scalar_select %p64, %s65, %s66
    %p70 = pneg %p64
    %p71 = scmp.eq.s32.totalorder %s13, 1
    %p72 = por %p70, %p71
    %p73 = scmp.ne.s32.totalorder %s65, %s68
    %p74 = scmp.eq.s32.totalorder %s13, 0
    %p75 = por %p73, %p74
    %p76 = scmp.ne.s32.totalorder %s65, %s68
    %p77 = scmp.eq.s32.totalorder %s18, 1
    %p78 = por %p76, %p77
    %p79 = scmp.ne.s32.totalorder %s68, %s69
    %p80 = scmp.eq.s32.totalorder %s18, 0
    %p81 = por %p79, %p80
    %p82 = scmp.ne.s32.totalorder %s68, %s69
    %p83 = scmp.eq.s32.totalorder %s19, 1
    %p84 = por %p82, %p83
    %p86 = scmp.ne.s32.totalorder %s69, %s85
    %p87 = scmp.eq.s32.totalorder %s19, 0
    %p88 = por %p86, %p87
    %s90 = sadd.s32 %s89, 1
    %p93 = scmp.eq.s32.totalorder %s13, 1
    %p94 = scmp.ne.s32.totalorder %s89, %s91
    %p95 = scmp.eq.s32.totalorder %s13, 0
    %p96 = por %p94, %p95
    %p97 = scmp.ne.s32.totalorder %s89, %s91
    %p98 = scmp.eq.s32.totalorder %s18, 1
    %p99 = por %p97, %p98
    %p100 = scmp.ne.s32.totalorder %s91, %s92
    %p101 = scmp.eq.s32.totalorder %s18, 0
    %p102 = por %p100, %p101
    %p103 = scmp.ne.s32.totalorder %s91, %s92
    %p104 = scmp.eq.s32.totalorder %s19, 1
    %p105 = por %p103, %p104
    %p107 = scmp.ne.s32.totalorder %s92, %s106
    %p108 = scmp.eq.s32.totalorder %s19, 0
    %p109 = por %p107, %p108
    %s111 = sadd.s32 %s110, 1
    %p114 = scmp.eq.s32.totalorder %s13, 1
    %p115 = scmp.ne.s32.totalorder %s110, %s112
    %p116 = scmp.eq.s32.totalorder %s13, 0
    %p117 = por %p115, %p116
    %p118 = scmp.ne.s32.totalorder %s110, %s112
    %p119 = scmp.eq.s32.totalorder %s18, 1
    %p120 = por %p118, %p119
    %p121 = scmp.ne.s32.totalorder %s112, %s113
    %p122 = scmp.eq.s32.totalorder %s18, 0
    %p123 = por %p121, %p122
    %p124 = scmp.ne.s32.totalorder %s112, %s113
    %p125 = scmp.eq.s32.totalorder %s19, 1
    %p126 = por %p124, %p125
    %p128 = scmp.ne.s32.totalorder %s113, %s127
    %p129 = scmp.eq.s32.totalorder %s19, 0
    %p130 = por %p128, %p129
    %s132 = sadd.s32 %s131, 1
    %p135 = scmp.eq.s32.totalorder %s13, 1
    %p136 = scmp.ne.s32.totalorder %s131, %s133
    %p137 = scmp.eq.s32.totalorder %s13, 0
    %p138 = por %p136, %p137
    %p139 = scmp.ne.s32.totalorder %s131, %s133
    %p140 = scmp.eq.s32.totalorder %s18, 1
    %p141 = por %p139, %p140
    %p142 = scmp.ne.s32.totalorder %s133, %s134
    %p143 = scmp.eq.s32.totalorder %s18, 0
    %p144 = por %p142, %p143
    %p145 = scmp.ne.s32.totalorder %s133, %s134
    %p146 = scmp.eq.s32.totalorder %s19, 1
    %p147 = por %p145, %p146
    %p149 = scmp.ne.s32.totalorder %s134, %s148
    %p150 = scmp.eq.s32.totalorder %s19, 0
    %p151 = por %p149, %p150
    %s153 = sadd.s32 %s152, 1
    %p156 = scmp.eq.s32.totalorder %s13, 1
    %p157 = scmp.ne.s32.totalorder %s152, %s154
    %p158 = scmp.eq.s32.totalorder %s13, 0
    %p159 = por %p157, %p158
    %p160 = scmp.ne.s32.totalorder %s152, %s154
    %p161 = scmp.eq.s32.totalorder %s18, 1
    %p162 = por %p160, %p161
    %p163 = scmp.ne.s32.totalorder %s154, %s155
    %p164 = scmp.eq.s32.totalorder %s18, 0
    %p165 = por %p163, %p164
    %p166 = scmp.ne.s32.totalorder %s154, %s155
    %p167 = scmp.eq.s32.totalorder %s19, 1
    %p168 = por %p166, %p167
    %p170 = scmp.ne.s32.totalorder %s155, %s169
    %p171 = scmp.eq.s32.totalorder %s19, 0
    %p172 = por %p170, %p171
    %s174 = sadd.s32 %s173, 1
    %p177 = scmp.eq.s32.totalorder %s13, 1
    %p178 = scmp.ne.s32.totalorder %s173, %s175
    %p179 = scmp.eq.s32.totalorder %s13, 0
    %p180 = por %p178, %p179
    %p181 = scmp.ne.s32.totalorder %s173, %s175
    %p182 = scmp.eq.s32.totalorder %s18, 1
    %p183 = por %p181, %p182
    %p184 = scmp.ne.s32.totalorder %s175, %s176
    %p185 = scmp.eq.s32.totalorder %s18, 0
    %p186 = por %p184, %p185
    %p187 = scmp.ne.s32.totalorder %s175, %s176
    %p188 = scmp.eq.s32.totalorder %s19, 1
    %p189 = por %p187, %p188
    %p191 = scmp.ne.s32.totalorder %s176, %s190
    %p192 = scmp.eq.s32.totalorder %s19, 0
    %p193 = por %p191, %p192
    %s194 = ssub.s32 %s20, %s32
    %p195 = scmp.eq.s32.totalorder %s194, 0
    %s197 = sadd.s32 %s196, 1
    %s198 = scalar_select %p195, %s196, %s197
    %p201 = pneg %p195
    %p202 = scmp.eq.s32.totalorder %s13, 1
    %p203 = por %p201, %p202
    %p204 = scmp.ne.s32.totalorder %s196, %s199
    %p205 = scmp.eq.s32.totalorder %s13, 0
    %p206 = por %p204, %p205
    %p207 = scmp.ne.s32.totalorder %s196, %s199
    %p208 = scmp.eq.s32.totalorder %s18, 1
    %p209 = por %p207, %p208
    %p210 = scmp.ne.s32.totalorder %s199, %s200
    %p211 = scmp.eq.s32.totalorder %s18, 0
    %p212 = por %p210, %p211
    %p213 = scmp.ne.s32.totalorder %s199, %s200
    %p214 = scmp.eq.s32.totalorder %s19, 1
    %p215 = por %p213, %p214
    %p217 = scmp.ne.s32.totalorder %s200, %s216
    %p218 = scmp.eq.s32.totalorder %s19, 0
    %p219 = por %p217, %p218
    %p220 = scmp.le.s32.totalorder 1, %s13
    %p221 = scmp.lt.s32.totalorder %s13, 3
    %p222 = pnand %p220, %p221
    %p223 = pneg %p222
    // Predicated region
    $region9: #{tpu_custom_call.1} parent=5 // pred_check
      _
    $region10: #{tpu_custom_call.1} parent=5 // pred_check_branch
      %225 = sbr.rel (%p222) target = $region12
    $region11: #{tpu_custom_call.1} parent=5 // pred_region
      %s226 = ssub.s32 %s13, 1
      // Predicated region
      $region13: #{tpu_custom_call.1} parent=11 // pred_check
        %p227 = pneg %p102
      $region14: #{tpu_custom_call.1} parent=11 // pred_check_branch
        %229 = sbr.rel (%p227) target = $region16
      $region15: #{tpu_custom_call.1} parent=11 // pred_region
        _
      $region16: #{tpu_custom_call.1} parent=11 // pred_fallthru
        _
      // Predicated region
      $region17: #{tpu_custom_call.1} parent=11 // pred_check
        %p230 = pneg %p123
      $region18: #{tpu_custom_call.1} parent=11 // pred_check_branch
        %232 = sbr.rel (%p230) target = $region20
      $region19: #{tpu_custom_call.1} parent=11 // pred_region
        _
      $region20: #{tpu_custom_call.1} parent=11 // pred_fallthru
        _
      // Predicated region
      $region21: #{tpu_custom_call.1} parent=11 // pred_check
        %p233 = pneg %p144
      $region22: #{tpu_custom_call.1} parent=11 // pred_check_branch
        %235 = sbr.rel (%p233) target = $region24
      $region23: #{tpu_custom_call.1} parent=11 // pred_region
        _
      $region24: #{tpu_custom_call.1} parent=11 // pred_fallthru
        _
      // Predicated region
      $region25: #{tpu_custom_call.1} parent=11 // pred_check
        %p236 = pneg %p165
      $region26: #{tpu_custom_call.1} parent=11 // pred_check_branch
        %238 = sbr.rel (%p236) target = $region28
      $region27: #{tpu_custom_call.1} parent=11 // pred_region
        _
      $region28: #{tpu_custom_call.1} parent=11 // pred_fallthru
        _
      // Predicated region
      $region29: #{tpu_custom_call.1} parent=11 // pred_check
        %p239 = pneg %p186
      $region30: #{tpu_custom_call.1} parent=11 // pred_check_branch
        %241 = sbr.rel (%p239) target = $region32
      $region31: #{tpu_custom_call.1} parent=11 // pred_region
        _
      $region32: #{tpu_custom_call.1} parent=11 // pred_fallthru
        _
    $region12: #{tpu_custom_call.1} parent=5 // pred_fallthru
      _
    %p242 = scmp.lt.s32.totalorder %s13, 2
    // Predicated region
    $region33: #{tpu_custom_call.1} parent=5 // pred_check
      %p243 = pneg %p242
    $region34: #{tpu_custom_call.1} parent=5 // pred_check_branch
      %245 = sbr.rel (%p243) target = $region36
    $region35: #{tpu_custom_call.1} parent=5 // pred_region
      // Predicated region
      $region37: #{tpu_custom_call.1} parent=35 // pred_check
        %p246 = pneg %p47
      $region38: #{tpu_custom_call.1} parent=35 // pred_check_branch
        %248 = sbr.rel (%p246) target = $region40
      $region39: #{tpu_custom_call.1} parent=35 // pred_region
        %p249 = scmp.lt.s32.totalorder %s20, 1
        %s250 = scalar_select %p249, %s20, 1
        %p251 = scmp.lt.s32.totalorder %s21, 0
        %s252 = scalar_select %p251, %s21, 0
        %s253 = sadd.s32 %s252, %s250
        %s254 = smul.addr %s253, 4
        %s255 = scalar_lea.vmem %s0, %s254
      $region40: #{tpu_custom_call.1} parent=35 // pred_fallthru
        _
      // Predicated region
      $region41: #{tpu_custom_call.1} parent=35 // pred_check
        %p256 = pneg %p75
      $region42: #{tpu_custom_call.1} parent=35 // pred_check_branch
        %258 = sbr.rel (%p256) target = $region44
      $region43: #{tpu_custom_call.1} parent=35 // pred_region
        %p259 = scmp.lt.s32.totalorder %s20, 1
        %s260 = scalar_select %p259, %s20, 1
        %p261 = scmp.lt.s32.totalorder %s21, 0
        %s262 = scalar_select %p261, %s21, 0
        %s263 = sadd.s32 %s262, %s260
        %s264 = smul.addr %s263, 4
        %s265 = scalar_lea.vmem %s1, %s264
      $region44: #{tpu_custom_call.1} parent=35 // pred_fallthru
        _
    $region36: #{tpu_custom_call.1} parent=5 // pred_fallthru
      _
    %p266 = scmp.le.s32.totalorder 1, %s13
    %p267 = scmp.lt.s32.totalorder %s13, 3
    %p268 = pnand %p266, %p267
    %p269 = pneg %p268
    // Predicated region
    $region45: #{tpu_custom_call.1} parent=5 // pred_check
      _
    $region46: #{tpu_custom_call.1} parent=5 // pred_check_branch
      %271 = sbr.rel (%p268) target = $region48
    $region47: #{tpu_custom_call.1} parent=5 // pred_region
      %s272 = ssub.s32 %s13, 1
      %p273 = scmp.lt.s32.totalorder %s22, 1
      %s274 = scalar_select %p273, %s22, 1
      %p275 = scmp.lt.s32.totalorder %s23, 0
      %s276 = scalar_select %p275, %s23, 0
      %s277 = sadd.s32 %s276, %s274
      %s278 = smul.addr %s277, 4
      %s279 = scalar_lea.vmem %s0, %s278
      %p280 = pneg %p53
      %p281 = pneg %p50
      %p282 = scmp.lt.s32.totalorder %s22, 1
      %s283 = scalar_select %p282, %s22, 1
      %p284 = scmp.lt.s32.totalorder %s23, 0
      %s285 = scalar_select %p284, %s23, 0
      %s286 = sadd.s32 %s285, %s283
      %s287 = smul.addr %s286, 4
      %s288 = scalar_lea.vmem %s1, %s287
      %p289 = pneg %p81
      %p290 = pneg %p78
      %p291 = pneg %p102
      %p292 = pneg %p99
      %p293 = pneg %p123
      %p294 = pneg %p120
      %p295 = pneg %p144
      %p296 = pneg %p141
      %p297 = pneg %p165
      %p298 = pneg %p162
      %p299 = pneg %p186
      %p300 = pneg %p183
      %p301 = pneg %p212
      %p302 = pneg %p209
      %p303 = scmp.lt.s32.totalorder %s22, 1
      %s304 = scalar_select %p303, %s22, 1
      %s305 = smul.addr %s304, 8
      %s306 = smul.addr %s305, 8
      %s307 = scalar_lea.vmem %s7, %s306
      %p308 = scmp.lt.s32.totalorder %s22, 1
      %s309 = scalar_select %p308, %s22, 1
      %p310 = scmp.lt.s32.totalorder %s23, 0
      %s311 = scalar_select %p310, %s23, 0
      %s312 = sadd.s32 %s311, %s309
      %s313 = smul.addr %s312, 4
      %s314 = scalar_lea.vmem %s0, %s313
      %p315 = scmp.lt.s32.totalorder %s22, 1
      %s316 = scalar_select %p315, %s22, 1
      %p317 = scmp.lt.s32.totalorder %s23, 0
      %s318 = scalar_select %p317, %s23, 0
      %s319 = sadd.s32 %s318, %s316
      %s320 = smul.addr %s319, 4
      %s321 = scalar_lea.vmem %s1, %s320
      %p322 = scmp.lt.s32.totalorder %s22, 1
      %s323 = scalar_select %p322, %s22, 1
      %s324 = smul.addr %s323, 8
      %s325 = smul.addr %s324, 8
      %s326 = scalar_lea.vmem %s7, %s325
      %v327 = vld [vmem:[%s314] sm:$0xf]
      %v328 = vld [vmem:[%s321] sm:$0x7]
      %v329 = vld [vmem:[%s2] sm:$0xff]
      %v330 = vld [vmem:[%s2 + $0x8] sm:$0xff]
      %v331 = vld [vmem:[%s2 + $0x10] sm:$0xff]
      %v332 = vld [vmem:[%s2 + $0x18] sm:$0xff]
      %v333 = vld [vmem:[%s3] sm:$0xff]
      %v334 = vld [vmem:[%s3 + $0x8] sm:$0xff]
      %v335 = vld [vmem:[%s3 + $0x10] sm:$0xff]
      %v336 = vld [vmem:[%s3 + $0x18] sm:$0xff]
      %vm337 = vcmask 23552
      %v339 = vsel %vm337, %v333, 0
      %v342 = vsel %vm337, %v334, 0
      %v345 = vsel %vm337, %v335, 0
      %v348 = vsel %vm337, %v336, 0
      %vm350 = vcmask 1042432
      %v352 = vsel %vm350, %v328, 0
      %354 = vmatprep.subr.mxu0 0.0
      %355 = vmatpush1.msra.mxu0 0.0
      %356 = vmatprep.subr.mxu0 0.0
      %357 = vmatpush1.msra.mxu0 0.0
      %358 = vmatprep.subr.mxu0 0.0
      %359 = vmatpush1.msra.mxu0 0.0
      %360 = vmatprep.subr.mxu0 0.0
      %361 = vmatpush1.msra.mxu0 0.0
      %362 = vmatprep.subr.mxu0 0.0
      %363 = vmatpush1.msra.mxu0 0.0
      %364 = vmatprep.subr.mxu0 0.0
      %365 = vmatpush1.msra.mxu0 0.0
      %366 = vmatprep.subr.mxu0 0.0
      %367 = vmatpush1.msra.mxu0 0.0
      %368 = vmatprep.subr.mxu0 0.0
      %369 = vmatpush1.msra.mxu0 0.0
      %370 = vmatprep.subr.mxu0 0.0
      %371 = vmatpush1.msra.mxu0 0.0
      %372 = vmatprep.subr.mxu0 0.0
      %373 = vmatpush1.msra.mxu0 0.0
      %374 = vmatprep.subr.mxu0 0.0
      %375 = vmatpush1.msra.mxu0 0.0
      %376 = vmatprep.subr.mxu0 0.0
      %377 = vmatpush1.msra.mxu0 0.0
      %378 = vmatprep.subr.mxu0 0.0
      %379 = vmatpush1.msra.mxu0 0.0
      %380 = vmatprep.subr.mxu0 0.0
      %381 = vmatpush1.msra.mxu0 0.0
      %382 = vmatprep.subr.mxu0 0.0
      %383 = vmatpush1.msra.mxu0 0.0
      %384 = vmatprep.subr.mxu0 0.0
      %385 = vmatpush1.msra.mxu0 %v352
      %386 = vmatprep.subr.mxu0 0.0
      %387 = vmatpush2.msra.mxu0 0.0
      %388 = vmatprep.subr.mxu0 0.0
      %389 = vmatpush2.msra.mxu0 0.0
      %390 = vmatprep.subr.mxu0 0.0
      %391 = vmatpush2.msra.mxu0 0.0
      %392 = vmatprep.subr.mxu0 0.0
      %393 = vmatpush2.msra.mxu0 0.0
      %394 = vmatprep.subr.mxu0 0.0
      %395 = vmatpush2.msra.mxu0 0.0
      %396 = vmatprep.subr.mxu0 0.0
      %397 = vmatpush2.msra.mxu0 0.0
      %398 = vmatprep.subr.mxu0 0.0
      %399 = vmatpush2.msra.mxu0 0.0
      %400 = vmatprep.subr.mxu0 0.0
      %401 = vmatpush2.msra.mxu0 0.0
      %402 = vmatprep.subr.mxu0 0.0
      %403 = vmatpush2.msra.mxu0 0.0
      %404 = vmatprep.subr.mxu0 0.0
      %405 = vmatpush2.msra.mxu0 0.0
      %406 = vmatprep.subr.mxu0 0.0
      %407 = vmatpush2.msra.mxu0 0.0
      %408 = vmatprep.subr.mxu0 0.0
      %409 = vmatpush2.msra.mxu0 0.0
      %410 = vmatprep.subr.mxu0 0.0
      %411 = vmatpush2.msra.mxu0 0.0
      %412 = vmatprep.subr.mxu0 0.0
      %413 = vmatpush2.msra.mxu0 0.0
      %414 = vmatprep.subr.mxu0 0.0
      %415 = vmatpush2.msra.mxu0 0.0
      %416 = vmatprep.subr.mxu0 0.0
      %417 = vmatpush2.msra.mxu0 0.0
      %418 = vmatprep.mubr.f32.mxu0 0.0
      %419 = vmatmul.mubr.f32.gmra.mxu0 %v339
      %v420 = vpop.f32.mrf.mxu0
      %v421 = vadd.f32 0.0, %v420
      %v422 = vpop.f32.mrf.mxu0
      %423 = vmatprep.mubr.f32.mxu0 0.0
      %424 = vmatmul.mubr.f32.gmra.mxu0 %v342
      %v425 = vpop.f32.mrf.mxu0
      %v426 = vadd.f32 0.0, %v425
      %v427 = vpop.f32.mrf.mxu0
      %428 = vmatprep.mubr.f32.mxu0 0.0
      %429 = vmatmul.mubr.f32.gmra.mxu0 %v345
      %v430 = vpop.f32.mrf.mxu0
      %v431 = vadd.f32 0.0, %v430
      %v432 = vpop.f32.mrf.mxu0
      %433 = vmatprep.mubr.f32.mxu0 0.0
      %434 = vmatmul.mubr.f32.gmra.mxu0 %v348
      %v435 = vpop.f32.mrf.mxu0
      %v436 = vadd.f32 0.0, %v435
      %v437 = vpop.f32.mrf.mxu0
      %438 = vdwg.mxu0
      %vm439 = vcmask 31744
      %v441 = vsel %vm439, %v329, 0
      %v444 = vsel %vm439, %v330, 0
      %v447 = vsel %vm439, %v331, 0
      %v450 = vsel %vm439, %v332, 0
      %vm452 = vcmask 1043456
      %v454 = vsel %vm452, %v327, 0
      %456 = vmatprep.subr.mxu0 0.0
      %457 = vmatpush1.msra.mxu0 0.0
      %458 = vmatprep.subr.mxu0 0.0
      %459 = vmatpush1.msra.mxu0 0.0
      %460 = vmatprep.subr.mxu0 0.0
      %461 = vmatpush1.msra.mxu0 0.0
      %462 = vmatprep.subr.mxu0 0.0
      %463 = vmatpush1.msra.mxu0 0.0
      %464 = vmatprep.subr.mxu0 0.0
      %465 = vmatpush1.msra.mxu0 0.0
      %466 = vmatprep.subr.mxu0 0.0
      %467 = vmatpush1.msra.mxu0 0.0
      %468 = vmatprep.subr.mxu0 0.0
      %469 = vmatpush1.msra.mxu0 0.0
      %470 = vmatprep.subr.mxu0 0.0
      %471 = vmatpush1.msra.mxu0 0.0
      %472 = vmatprep.subr.mxu0 0.0
      %473 = vmatpush1.msra.mxu0 0.0
      %474 = vmatprep.subr.mxu0 0.0
      %475 = vmatpush1.msra.mxu0 0.0
      %476 = vmatprep.subr.mxu0 0.0
      %477 = vmatpush1.msra.mxu0 0.0
      %478 = vmatprep.subr.mxu0 0.0
      %479 = vmatpush1.msra.mxu0 0.0
      %480 = vmatprep.subr.mxu0 0.0
      %481 = vmatpush1.msra.mxu0 0.0
      %482 = vmatprep.subr.mxu0 0.0
      %483 = vmatpush1.msra.mxu0 0.0
      %484 = vmatprep.subr.mxu0 0.0
      %485 = vmatpush1.msra.mxu0 0.0
      %486 = vmatprep.subr.mxu0 0.0
      %487 = vmatpush1.msra.mxu0 %v454
      %488 = vmatprep.subr.mxu0 0.0
      %489 = vmatpush2.msra.mxu0 0.0
      %490 = vmatprep.subr.mxu0 0.0
      %491 = vmatpush2.msra.mxu0 0.0
      %492 = vmatprep.subr.mxu0 0.0
      %493 = vmatpush2.msra.mxu0 0.0
      %494 = vmatprep.subr.mxu0 0.0
      %495 = vmatpush2.msra.mxu0 0.0
      %496 = vmatprep.subr.mxu0 0.0
      %497 = vmatpush2.msra.mxu0 0.0
      %498 = vmatprep.subr.mxu0 0.0
      %499 = vmatpush2.msra.mxu0 0.0
      %500 = vmatprep.subr.mxu0 0.0
      %501 = vmatpush2.msra.mxu0 0.0
      %502 = vmatprep.subr.mxu0 0.0
      %503 = vmatpush2.msra.mxu0 0.0
      %504 = vmatprep.subr.mxu0 0.0
      %505 = vmatpush2.msra.mxu0 0.0
      %506 = vmatprep.subr.mxu0 0.0
      %507 = vmatpush2.msra.mxu0 0.0
      %508 = vmatprep.subr.mxu0 0.0
      %509 = vmatpush2.msra.mxu0 0.0
      %510 = vmatprep.subr.mxu0 0.0
      %511 = vmatpush2.msra.mxu0 0.0
      %512 = vmatprep.subr.mxu0 0.0
      %513 = vmatpush2.msra.mxu0 0.0
      %514 = vmatprep.subr.mxu0 0.0
      %515 = vmatpush2.msra.mxu0 0.0
      %516 = vmatprep.subr.mxu0 0.0
      %517 = vmatpush2.msra.mxu0 0.0
      %518 = vmatprep.subr.mxu0 0.0
      %519 = vmatpush2.msra.mxu0 0.0
      %520 = vmatprep.mubr.f32.mxu0 0.0
      %521 = vmatmul.mubr.f32.gmra.mxu0 %v441
      %v522 = vpop.f32.mrf.mxu0
      %v523 = vadd.f32 %v421, %v522
      %v524 = vpop.f32.mrf.mxu0
      %525 = vmatprep.mubr.f32.mxu0 0.0
      %526 = vmatmul.mubr.f32.gmra.mxu0 %v444
      %v527 = vpop.f32.mrf.mxu0
      %v528 = vadd.f32 %v426, %v527
      %v529 = vpop.f32.mrf.mxu0
      %530 = vmatprep.mubr.f32.mxu0 0.0
      %531 = vmatmul.mubr.f32.gmra.mxu0 %v447
      %v532 = vpop.f32.mrf.mxu0
      %v533 = vadd.f32 %v431, %v532
      %v534 = vpop.f32.mrf.mxu0
      %535 = vmatprep.mubr.f32.mxu0 0.0
      %536 = vmatmul.mubr.f32.gmra.mxu0 %v450
      %v537 = vpop.f32.mrf.mxu0
      %v538 = vadd.f32 %v436, %v537
      %v539 = vpop.f32.mrf.mxu0
      %540 = vdwg.mxu0
      %v541 = vld [vmem:[%s4] sm:$0xff]
      %v542 = vld [vmem:[%s4 + $0x8] sm:$0xff]
      %v543 = vld [vmem:[%s4 + $0x10] sm:$0xff]
      %v544 = vld [vmem:[%s4 + $0x18] sm:$0xff]
      %546 = vset.pattern.permute.xlu0 0
      %547 = vperm.xlu0 %546, %v541
      %v548 = vpop.permute.xlu0 %547
      %551 = vset.pattern.permute.xlu0 0
      %552 = vperm.xlu0 %551, %v542
      %v553 = vpop.permute.xlu0 %552
      %556 = vset.pattern.permute.xlu0 0
      %557 = vperm.xlu0 %556, %v543
      %v558 = vpop.permute.xlu0 %557
      %561 = vset.pattern.permute.xlu0 0
      %562 = vperm.xlu0 %561, %v544
      %v563 = vpop.permute.xlu0 %562
      %v565 = vadd.f32 %v523, %v548
      %v566 = vadd.f32 %v528, %v553
      %v567 = vadd.f32 %v533, %v558
      %v568 = vadd.f32 %v538, %v563
      %v569 = vmax.f32 %v565, 0.0
      %v570 = vmax.f32 %v566, 0.0
      %v571 = vmax.f32 %v567, 0.0
      %v572 = vmax.f32 %v568, 0.0
      %v573 = vld [vmem:[%s5] sm:$0xff]
      %v574 = vld [vmem:[%s5 + $0x8] sm:$0xff]
      %v575 = vld [vmem:[%s5 + $0x10] sm:$0xff]
      %v576 = vld [vmem:[%s5 + $0x18] sm:$0xff]
      %v577 = vld [vmem:[%s5 + $0x20] sm:$0xff]
      %v578 = vld [vmem:[%s5 + $0x28] sm:$0xff]
      %v579 = vld [vmem:[%s5 + $0x30] sm:$0xff]
      %v580 = vld [vmem:[%s5 + $0x38] sm:$0xff]
      %v581 = vld [vmem:[%s6] sm:$0xff]
      %v582 = vld [vmem:[%s6 + $0x8] sm:$0xff]
      %v583 = vld [vmem:[%s6 + $0x10] sm:$0xff]
      %v584 = vld [vmem:[%s6 + $0x18] sm:$0xff]
      %v585 = vld [vmem:[%s6 + $0x20] sm:$0xff]
      %v586 = vld [vmem:[%s6 + $0x28] sm:$0xff]
      %v587 = vld [vmem:[%s6 + $0x30] sm:$0xff]
      %v588 = vld [vmem:[%s6 + $0x38] sm:$0xff]
      %590 = vset.pattern.permute.xlu0 0
      %591 = vperm.xlu0 %590, %v581
      %v592 = vpop.permute.xlu0 %591
      %595 = vset.pattern.permute.xlu0 0
      %596 = vperm.xlu0 %595, %v582
      %v597 = vpop.permute.xlu0 %596
      %600 = vset.pattern.permute.xlu0 0
      %601 = vperm.xlu0 %600, %v583
      %v602 = vpop.permute.xlu0 %601
      %605 = vset.pattern.permute.xlu0 0
      %606 = vperm.xlu0 %605, %v584
      %v607 = vpop.permute.xlu0 %606
      %610 = vset.pattern.permute.xlu0 0
      %611 = vperm.xlu0 %610, %v585
      %v612 = vpop.permute.xlu0 %611
      %615 = vset.pattern.permute.xlu0 0
      %616 = vperm.xlu0 %615, %v586
      %v617 = vpop.permute.xlu0 %616
      %620 = vset.pattern.permute.xlu0 0
      %621 = vperm.xlu0 %620, %v587
      %v622 = vpop.permute.xlu0 %621
      %625 = vset.pattern.permute.xlu0 0
      %626 = vperm.xlu0 %625, %v588
      %v627 = vpop.permute.xlu0 %626
      %vm629 = vcmask 261120
      %v631 = vsel %vm629, %v573, 0
      %v634 = vsel %vm629, %v574, 0
      %v637 = vsel %vm629, %v575, 0
      %v640 = vsel %vm629, %v576, 0
      %v643 = vsel %vm629, %v577, 0
      %v646 = vsel %vm629, %v578, 0
      %v649 = vsel %vm629, %v579, 0
      %v652 = vsel %vm629, %v580, 0
      %654 = vmatprep.subr.mxu0 0.0
      %655 = vmatpush1.msra.mxu0 0.0
      %656 = vmatprep.subr.mxu0 0.0
      %657 = vmatpush1.msra.mxu0 0.0
      %658 = vmatprep.subr.mxu0 0.0
      %659 = vmatpush1.msra.mxu0 0.0
      %660 = vmatprep.subr.mxu0 0.0
      %661 = vmatpush1.msra.mxu0 0.0
      %662 = vmatprep.subr.mxu0 0.0
      %663 = vmatpush1.msra.mxu0 0.0
      %664 = vmatprep.subr.mxu0 0.0
      %665 = vmatpush1.msra.mxu0 0.0
      %666 = vmatprep.subr.mxu0 0.0
      %667 = vmatpush1.msra.mxu0 0.0
      %668 = vmatprep.subr.mxu0 0.0
      %669 = vmatpush1.msra.mxu0 0.0
      %670 = vmatprep.subr.mxu0 0.0
      %671 = vmatpush1.msra.mxu0 0.0
      %672 = vmatprep.subr.mxu0 0.0
      %673 = vmatpush1.msra.mxu0 0.0
      %674 = vmatprep.subr.mxu0 0.0
      %675 = vmatpush1.msra.mxu0 0.0
      %676 = vmatprep.subr.mxu0 0.0
      %677 = vmatpush1.msra.mxu0 0.0
      %678 = vmatprep.subr.mxu0 0.0
      %679 = vmatpush1.msra.mxu0 %v572
      %680 = vmatprep.subr.mxu0 0.0
      %681 = vmatpush1.msra.mxu0 %v571
      %682 = vmatprep.subr.mxu0 0.0
      %683 = vmatpush1.msra.mxu0 %v570
      %684 = vmatprep.subr.mxu0 0.0
      %685 = vmatpush1.msra.mxu0 %v569
      %686 = vmatprep.subr.mxu0 0.0
      %687 = vmatpush2.msra.mxu0 0.0
      %688 = vmatprep.subr.mxu0 0.0
      %689 = vmatpush2.msra.mxu0 0.0
      %690 = vmatprep.subr.mxu0 0.0
      %691 = vmatpush2.msra.mxu0 0.0
      %692 = vmatprep.subr.mxu0 0.0
      %693 = vmatpush2.msra.mxu0 0.0
      %694 = vmatprep.subr.mxu0 0.0
      %695 = vmatpush2.msra.mxu0 0.0
      %696 = vmatprep.subr.mxu0 0.0
      %697 = vmatpush2.msra.mxu0 0.0
      %698 = vmatprep.subr.mxu0 0.0
      %699 = vmatpush2.msra.mxu0 0.0
      %700 = vmatprep.subr.mxu0 0.0
      %701 = vmatpush2.msra.mxu0 0.0
      %702 = vmatprep.subr.mxu0 0.0
      %703 = vmatpush2.msra.mxu0 0.0
      %704 = vmatprep.subr.mxu0 0.0
      %705 = vmatpush2.msra.mxu0 0.0
      %706 = vmatprep.subr.mxu0 0.0
      %707 = vmatpush2.msra.mxu0 0.0
      %708 = vmatprep.subr.mxu0 0.0
      %709 = vmatpush2.msra.mxu0 0.0
      %710 = vmatprep.subr.mxu0 0.0
      %711 = vmatpush2.msra.mxu0 0.0
      %712 = vmatprep.subr.mxu0 0.0
      %713 = vmatpush2.msra.mxu0 0.0
      %714 = vmatprep.subr.mxu0 0.0
      %715 = vmatpush2.msra.mxu0 0.0
      %716 = vmatprep.subr.mxu0 0.0
      %717 = vmatpush2.msra.mxu0 0.0
      %718 = vmatprep.mubr.f32.mxu0 0.0
      %719 = vmatmul.mubr.f32.gmra.mxu0 %v631
      %v720 = vpop.f32.mrf.mxu0
      %v721 = vadd.f32 %v592, %v720
      %v722 = vpop.f32.mrf.mxu0
      %723 = vmatprep.mubr.f32.mxu0 0.0
      %724 = vmatmul.mubr.f32.gmra.mxu0 %v634
      %v725 = vpop.f32.mrf.mxu0
      %v726 = vadd.f32 %v597, %v725
      %v727 = vpop.f32.mrf.mxu0
      %728 = vmatprep.mubr.f32.mxu0 0.0
      %729 = vmatmul.mubr.f32.gmra.mxu0 %v637
      %v730 = vpop.f32.mrf.mxu0
      %v731 = vadd.f32 %v602, %v730
      %v732 = vpop.f32.mrf.mxu0
      %733 = vmatprep.mubr.f32.mxu0 0.0
      %734 = vmatmul.mubr.f32.gmra.mxu0 %v640
      %v735 = vpop.f32.mrf.mxu0
      %v736 = vadd.f32 %v607, %v735
      %v737 = vpop.f32.mrf.mxu0
      %738 = vmatprep.mubr.f32.mxu0 0.0
      %739 = vmatmul.mubr.f32.gmra.mxu0 %v643
      %v740 = vpop.f32.mrf.mxu0
      %v741 = vadd.f32 %v612, %v740
      %v742 = vpop.f32.mrf.mxu0
      %743 = vmatprep.mubr.f32.mxu0 0.0
      %744 = vmatmul.mubr.f32.gmra.mxu0 %v646
      %v745 = vpop.f32.mrf.mxu0
      %v746 = vadd.f32 %v617, %v745
      %v747 = vpop.f32.mrf.mxu0
      %748 = vmatprep.mubr.f32.mxu0 0.0
      %749 = vmatmul.mubr.f32.gmra.mxu0 %v649
      %v750 = vpop.f32.mrf.mxu0
      %v751 = vadd.f32 %v622, %v750
      %v752 = vpop.f32.mrf.mxu0
      %753 = vmatprep.mubr.f32.mxu0 0.0
      %754 = vmatmul.mubr.f32.gmra.mxu0 %v652
      %v755 = vpop.f32.mrf.mxu0
      %v756 = vadd.f32 %v627, %v755
      %v757 = vpop.f32.mrf.mxu0
      %758 = vdwg.mxu0
      %v759 = vmax.f32 %v721, 0.0
      %v760 = vmax.f32 %v726, 0.0
      %v761 = vmax.f32 %v731, 0.0
      %v762 = vmax.f32 %v736, 0.0
      %v763 = vmax.f32 %v741, 0.0
      %v764 = vmax.f32 %v746, 0.0
      %v765 = vmax.f32 %v751, 0.0
      %v766 = vmax.f32 %v756, 0.0
      %vm767 = vcmask 130048
      %v768 = vsel %vm767, %v759, -inf
      %769 = vmax.xlane.f32.xlu0 %v768
      %v770 = vpop.xlane.xlu0 %769
      %v771 = vsel %vm767, %v760, -inf
      %772 = vmax.xlane.f32.xlu0 %v771
      %v773 = vpop.xlane.xlu0 %772
      %v774 = vsel %vm767, %v761, -inf
      %775 = vmax.xlane.f32.xlu0 %v774
      %v776 = vpop.xlane.xlu0 %775
      %v777 = vsel %vm767, %v762, -inf
      %778 = vmax.xlane.f32.xlu0 %v777
      %v779 = vpop.xlane.xlu0 %778
      %v780 = vsel %vm767, %v763, -inf
      %781 = vmax.xlane.f32.xlu0 %v780
      %v782 = vpop.xlane.xlu0 %781
      %v783 = vsel %vm767, %v764, -inf
      %784 = vmax.xlane.f32.xlu0 %v783
      %v785 = vpop.xlane.xlu0 %784
      %v786 = vsel %vm767, %v765, -inf
      %787 = vmax.xlane.f32.xlu0 %v786
      %v788 = vpop.xlane.xlu0 %787
      %v789 = vsel %vm767, %v766, -inf
      %790 = vmax.xlane.f32.xlu0 %v789
      %v791 = vpop.xlane.xlu0 %790
      %p792 = scmp.eq.s32.totalorder %s23, 0
      // Predicated region
      $region49: #{tpu_custom_call.1} parent=47 // pred_check
        %p793 = pneg %p792
      $region50: #{tpu_custom_call.1} parent=47 // pred_check_branch
        %795 = sbr.rel (%p793) target = $region52
      $region51: #{tpu_custom_call.1} parent=47 // pred_region
        %vm796 = vcmask 7168
        %797 = vst.msk [vmem:[%s326] sm:$0xff] %vm796, -inf
        %798 = vst.msk [vmem:[%s326 + $0x8] sm:$0xff] %vm796, -inf
        %799 = vst.msk [vmem:[%s326 + $0x10] sm:$0xff] %vm796, -inf
        %800 = vst.msk [vmem:[%s326 + $0x18] sm:$0xff] %vm796, -inf
        %801 = vst.msk [vmem:[%s326 + $0x20] sm:$0xff] %vm796, -inf
        %802 = vst.msk [vmem:[%s326 + $0x28] sm:$0xff] %vm796, -inf
        %803 = vst.msk [vmem:[%s326 + $0x30] sm:$0xff] %vm796, -inf
        %804 = vst.msk [vmem:[%s326 + $0x38] sm:$0xff] %vm796, -inf
      $region52: #{tpu_custom_call.1} parent=47 // pred_fallthru
        _
      %v805 = vld [vmem:[%s326] sm:$0xff]
      %v806 = vld [vmem:[%s326 + $0x8] sm:$0xff]
      %v807 = vld [vmem:[%s326 + $0x10] sm:$0xff]
      %v808 = vld [vmem:[%s326 + $0x18] sm:$0xff]
      %v809 = vld [vmem:[%s326 + $0x20] sm:$0xff]
      %v810 = vld [vmem:[%s326 + $0x28] sm:$0xff]
      %v811 = vld [vmem:[%s326 + $0x30] sm:$0xff]
      %v812 = vld [vmem:[%s326 + $0x38] sm:$0xff]
      %v813 = vmax.f32 %v805, %v770
      %v814 = vmax.f32 %v806, %v773
      %v815 = vmax.f32 %v807, %v776
      %v816 = vmax.f32 %v808, %v779
      %v817 = vmax.f32 %v809, %v782
      %v818 = vmax.f32 %v810, %v785
      %v819 = vmax.f32 %v811, %v788
      %v820 = vmax.f32 %v812, %v791
      %vm821 = vcmask 7168
      %822 = vst.msk [vmem:[%s326] sm:$0xff] %vm821, %v813
      %823 = vst.msk [vmem:[%s326 + $0x8] sm:$0xff] %vm821, %v814
      %824 = vst.msk [vmem:[%s326 + $0x10] sm:$0xff] %vm821, %v815
      %825 = vst.msk [vmem:[%s326 + $0x18] sm:$0xff] %vm821, %v816
      %826 = vst.msk [vmem:[%s326 + $0x20] sm:$0xff] %vm821, %v817
      %827 = vst.msk [vmem:[%s326 + $0x28] sm:$0xff] %vm821, %v818
      %828 = vst.msk [vmem:[%s326 + $0x30] sm:$0xff] %vm821, %v819
      %829 = vst.msk [vmem:[%s326 + $0x38] sm:$0xff] %vm821, %v820
      %p830 = scmp.lt.s32.totalorder %s22, 1
      %s831 = scalar_select %p830, %s22, 1
      %s832 = smul.addr %s831, 8
      %s833 = smul.addr %s832, 8
      %s834 = scalar_lea.vmem %s7, %s833
      // Predicated region
      $region53: #{tpu_custom_call.1} parent=47 // pred_check
        %p835 = pneg %p209
      $region54: #{tpu_custom_call.1} parent=47 // pred_check_branch
        %837 = sbr.rel (%p835) target = $region56
      $region55: #{tpu_custom_call.1} parent=47 // pred_region
        _
      $region56: #{tpu_custom_call.1} parent=47 // pred_fallthru
        _
    $region48: #{tpu_custom_call.1} parent=5 // pred_fallthru
      _
    %p838 = scmp.le.s32.totalorder 2, %s13
    // Predicated region
    $region57: #{tpu_custom_call.1} parent=5 // pred_check
      %p839 = pneg %p838
    $region58: #{tpu_custom_call.1} parent=5 // pred_check_branch
      %841 = sbr.rel (%p839) target = $region60
    $region59: #{tpu_custom_call.1} parent=5 // pred_region
      %s842 = ssub.s32 %s13, 2
      // Predicated region
      $region61: #{tpu_custom_call.1} parent=59 // pred_check
        %p843 = pneg %p215
      $region62: #{tpu_custom_call.1} parent=59 // pred_check_branch
        %845 = sbr.rel (%p843) target = $region64
      $region63: #{tpu_custom_call.1} parent=59 // pred_region
        %p846 = scmp.lt.s32.totalorder %s24, 1
        %s847 = scalar_select %p846, %s24, 1
        %s848 = smul.addr %s847, 8
        %s849 = smul.addr %s848, 8
        %s850 = scalar_lea.vmem %s7, %s849
      $region64: #{tpu_custom_call.1} parent=59 // pred_fallthru
        _
    $region60: #{tpu_custom_call.1} parent=5 // pred_fallthru
      _
  $region6: #{tpu_custom_call.1} parent=0 // loop_footer
    %s17 = sadd.s32 1, %s13
  $region7: #{tpu_custom_call.1} parent=0 // loop_footer_branch
    %12 = sbr.rel target = $region3
  $region8: #{tpu_custom_call.1} parent=0 // loop_exit
    _

</llo_original>
